<compile_context>
chip_gen: v5e
topology: v5e:2x2
jax: 0.10.0
libtpu: 0.0.40
codegen_flags: <defaults>
</compile_context>

<pallas_src>
import jax
import jax.numpy as jnp
from jax.experimental import pallas as pl
from jax.experimental.pallas import tpu as pltpu


def _round_up(x, m):
    return (x + m - 1) // m * m


def _make_distance_loss_kernel(n_valid, tile, s_dim, need_mask):
    """Builds the pair-tile kernel; static sizes are closed over."""

    def kernel(i_tbl_ref, j_tbl_ref,          # scalar-prefetch (SMEM)
               e_i_ref, e_jt_ref,             # embedding blocks (mxu dtype)
               nrm_i_ref, nrm_jt_ref,         # precomputed ||e||^2 (f32)
               c_i_ref, c_jt_ref,             # center blocks (f32)
               out_ref):
        p = pl.program_id(0)
        ti = i_tbl_ref[p]
        tj = j_tbl_ref[p]

        # ---- pred squared distances: Gram / MXU formulation --------------
        gram = jnp.dot(e_i_ref[...], e_jt_ref[...],
                       preferred_element_type=jnp.float32)           # (tile, tile)
        pred_sq = jnp.maximum(
            nrm_i_ref[...] + nrm_jt_ref[...] - 2.0 * gram, 0.0)      # (tile, tile)

        # ---- gt squared distances: per-coordinate, lane-dense ------------
        c_i = c_i_ref[...]                    # (tile, S) f32
        c_jt = c_jt_ref[...]                  # (S, tile) f32
        gt_sq = None
        for k in range(s_dim):
            dd = c_i[:, k:k + 1] - c_jt[k:k + 1, :]                   # (tile, tile)
            gt_sq = dd * dd if gt_sq is None else gt_sq + dd * dd

        # ---- squared difference with a single EUP sqrt per element -------
        # (sqrt(a) - sqrt(b))^2 = a + b - 2*sqrt(a*b)   for a, b >= 0
        sq = pred_sq + gt_sq - 2.0 * jnp.sqrt(pred_sq * gt_sq)

        # ---- cheap boundary masking (only compiled in when N was padded) --
        if need_mask:
            row_ids = ti * tile + jax.lax.broadcasted_iota(
                jnp.int32, (tile, 1), 0)
            col_ids = tj * tile + jax.lax.broadcasted_iota(
                jnp.int32, (1, tile), 1)
            sq = sq * (row_ids < n_valid).astype(jnp.float32)
            sq = sq * (col_ids < n_valid).astype(jnp.float32)

        # ---- symmetry weight + sublane (VPU) partial reduce ----------------
        weight = jnp.where(ti == tj, jnp.float32(1.0), jnp.float32(2.0))
        out_ref[...] = (weight * jnp.sum(sq, axis=0, keepdims=True)
                        ).reshape(1, 1, tile)

    return kernel


def distance_loss(embeddings, centers, *, tile=256, mxu_dtype=jnp.float32):
    """Pallas implementation of DistanceLoss.forward given precomputed centers.

    `tile` is the square tile edge (MXU-aligned 256 by default; on v5e larger
    tiles such as 512 reduce e^T re-streaming; on v7x keep n_pad/tile >= 2 so
    the parallel pair axis can shard across both TensorCores).  Pass
    mxu_dtype=jnp.bfloat16 on v6e/v7x for full-rate MXU (epilogue stays f32).
    """
    embeddings = embeddings.astype(jnp.float32)
    centers = centers.astype(jnp.float32)
    n, d = embeddings.shape
    s_dim = centers.shape[1]

    if n <= tile:
        tile = max(_round_up(n, 8), 8)        # single-tile path, sublane-aligned
    n_pad = _round_up(n, tile)                # rows/cols share one tile size
    need_mask = n_pad != n
    nt = n_pad // tile

    # Padded operands (pad rows are zero -> masked out in-kernel when needed).
    e_p = jnp.pad(embeddings, ((0, n_pad - n), (0, 0)))    # (Np, D) f32
    c_p = jnp.pad(centers, ((0, n_pad - n), (0, 0)))       # (Np, S) f32

    # Squared norms precomputed once (f32), streamed as tiny blocks.
    nrm = jnp.sum(e_p * e_p, axis=1, keepdims=True)        # (Np, 1)
    nrm_t = nrm.T                                          # (1, Np)

    # MXU operands cast once in the wrapper (bf16 halves HBM traffic on v6e/v7x).
    e_mxu = e_p.astype(mxu_dtype)                          # (Np, D)
    e_mxu_t = e_mxu.T                                      # (D, Np)
    c_t = c_p.T                                            # (S, Np)

    # Upper-triangular (ti <= tj) tile-pair lookup tables -> 1-D grid.
    pairs_i, pairs_j = [], []
    for i in range(nt):
        for j in range(i, nt):
            pairs_i.append(i)
            pairs_j.append(j)
    num_pairs = len(pairs_i)
    i_tbl = jnp.asarray(pairs_i, jnp.int32)
    j_tbl = jnp.asarray(pairs_j, jnp.int32)

    kernel = _make_distance_loss_kernel(n, tile, s_dim, need_mask)

    partials = pl.pallas_call(
        kernel,
        out_shape=jax.ShapeDtypeStruct((num_pairs, 1, tile), jnp.float32),
        grid_spec=pltpu.PrefetchScalarGridSpec(
            num_scalar_prefetch=2,
            grid=(num_pairs,),
            in_specs=[
                # row / col embedding blocks (data-dependent via lookup tables)
                pl.BlockSpec((tile, d), lambda p, it, jt: (it[p], 0)),
                pl.BlockSpec((d, tile), lambda p, it, jt: (0, jt[p])),
                # precomputed squared norms
                pl.BlockSpec((tile, 1), lambda p, it, jt: (it[p], 0)),
                pl.BlockSpec((1, tile), lambda p, it, jt: (0, jt[p])),
                # center rows / cols
                pl.BlockSpec((tile, s_dim), lambda p, it, jt: (it[p], 0)),
                pl.BlockSpec((s_dim, tile), lambda p, it, jt: (0, jt[p])),
            ],
            out_specs=pl.BlockSpec((1, 1, tile), lambda p, it, jt: (p, 0, 0)),
        ),
        compiler_params=pltpu.CompilerParams(
            dimension_semantics=("parallel",)),
    )(i_tbl, j_tbl, e_mxu, e_mxu_t, nrm, nrm_t, c_p, c_t)

    # Final cross-lane reduce + mean over the true N x N matrix.
    return jnp.sum(partials, dtype=jnp.float32) / (n * n)


def get_cropped_bbox_centers(image_shape, crop_size, num_crops, key):
    """Synthetic stand-in for get_cropped_bboxes + get_bbox_centers.

    RandSpatialCropSamples picks `num_crops` random crop start coords inside the
    spatial extent of the image; the bbox center is start + crop_size / 2.
    """
    # TODO(synk): parsing monai RandSpatialCropSamples metadata has no Pallas
    # equivalent; crop start coordinates are generated deterministically here.
    spatial = jnp.asarray(image_shape[2:], jnp.int32)          # (S,)
    max_start = spatial - crop_size                            # inclusive bound
    starts = jax.random.randint(
        key, (num_crops, len(image_shape) - 2), 0, max_start + 1
    )
    centers = starts.astype(jnp.float32) + crop_size / 2.0     # (N, S)
    return centers


if __name__ == "__main__":
    key = jax.random.PRNGKey(0)
    k_img, k_emb, k_crop = jax.random.split(key, 3)

    num_crops, C, H, W = 8, 1, 16, 16       # N crop samples, NCHW layout
    crop_size = 8
    emb_dim = 32

    image = jax.random.normal(k_img, (num_crops, C, H, W), jnp.float32)
    embeddings = jax.random.normal(k_emb, (num_crops, emb_dim), jnp.float32)
    centers = get_cropped_bbox_centers(image.shape, crop_size, num_crops, k_crop)

    loss = distance_loss(embeddings, centers)
    loss = jax.block_until_ready(loss)

    # Pure-JAX reference of the same forward pass (direct-subtraction cdist).
    def _cdist(x):
        dxy = x[:, None, :] - x[None, :, :]
        return jnp.sqrt(jnp.sum(dxy * dxy, axis=-1))

    ref = jnp.mean((_cdist(embeddings.astype(jnp.float32)) - _cdist(centers)) ** 2)
    # Gram + one-sqrt formulation differs from direct subtraction by a few
    # ulps; allow a slightly loose tolerance.
    assert jnp.allclose(loss, ref, rtol=1e-4, atol=1e-5), (loss, ref)

    print("KERNEL_OK")
</pallas_src>

<mosaic_0001>
module attributes {stable_mosaic.version = 11 : i64} {
  func.func @kernel(%arg0: i32, %arg1: memref<1xi32, #tpu.memory_space<smem>>, %arg2: memref<1xi32, #tpu.memory_space<smem>>, %arg3: memref<8x32xf32, #tpu.memory_space<vmem>>, %arg4: memref<32x8xf32, #tpu.memory_space<vmem>>, %arg5: memref<8x1xf32, #tpu.memory_space<vmem>>, %arg6: memref<1x8xf32, #tpu.memory_space<vmem>>, %arg7: memref<8x2xf32, #tpu.memory_space<vmem>>, %arg8: memref<2x8xf32, #tpu.memory_space<vmem>>, %arg9: memref<1x1x8xf32, #tpu.memory_space<vmem>>) attributes {dimension_semantics = [#tpu.dimension_semantics<parallel>], iteration_bounds = array<i64: 1>, scalar_prefetch = 2 : i64, scratch_operands = 0 : i64, tpu.core_type = #tpu.core_type<tc>, window_params = [{transform_indices = @transform_0, window_bounds = array<i64: 8, 32>}, {transform_indices = @transform_1, window_bounds = array<i64: 32, 8>}, {transform_indices = @transform_2, window_bounds = array<i64: 8, 1>}, {transform_indices = @transform_3, window_bounds = array<i64: 1, 8>}, {transform_indices = @transform_4, window_bounds = array<i64: 8, 2>}, {transform_indices = @transform_5, window_bounds = array<i64: 2, 8>}, {transform_indices = @transform_6, window_bounds = array<i64: 1, 1, 8>}]} {
    %0 = arith.index_cast %arg0 : i32 to index
    %1 = memref.load %arg1[%0] : memref<1xi32, #tpu.memory_space<smem>>
    %2 = arith.index_cast %arg0 : i32 to index
    %3 = memref.load %arg2[%2] : memref<1xi32, #tpu.memory_space<smem>>
    %c0 = arith.constant 0 : index
    %c0_0 = arith.constant 0 : index
    %4 = vector.load %arg3[%c0, %c0_0] : memref<8x32xf32, #tpu.memory_space<vmem>>, vector<8x32xf32>
    %c0_1 = arith.constant 0 : index
    %c0_2 = arith.constant 0 : index
    %5 = vector.load %arg4[%c0_1, %c0_2] : memref<32x8xf32, #tpu.memory_space<vmem>>, vector<32x8xf32>
    %cst = arith.constant dense<0.000000e+00> : vector<8x8xf32>
    %6 = tpu.matmul %4, %5, %cst {dimension_numbers = #tpu.dot_dimension_numbers<[1], [0], [0], [1], [0, 0, 1, 1], [], []>} : vector<8x32xf32>, vector<32x8xf32>, vector<8x8xf32> -> vector<8x8xf32>
    %c0_3 = arith.constant 0 : index
    %c0_4 = arith.constant 0 : index
    %7 = vector.load %arg5[%c0_3, %c0_4] : memref<8x1xf32, #tpu.memory_space<vmem>>, vector<8x1xf32>
    %c0_5 = arith.constant 0 : index
    %c0_6 = arith.constant 0 : index
    %8 = vector.load %arg6[%c0_5, %c0_6] : memref<1x8xf32, #tpu.memory_space<vmem>>, vector<1x8xf32>
    %9 = vector.broadcast %7 : vector<8x1xf32> to vector<8x8xf32>
    %10 = vector.broadcast %8 : vector<1x8xf32> to vector<8x8xf32>
    %11 = arith.addf %9, %10 : vector<8x8xf32>
    %cst_7 = arith.constant 2.000000e+00 : f32
    %12 = vector.broadcast %cst_7 : f32 to vector<8x8xf32>
    %13 = arith.mulf %12, %6 : vector<8x8xf32>
    %14 = arith.subf %11, %13 : vector<8x8xf32>
    %cst_8 = arith.constant 0.000000e+00 : f32
    %15 = vector.broadcast %cst_8 : f32 to vector<8x8xf32>
    %16 = arith.maximumf %14, %15 : vector<8x8xf32>
    %c0_9 = arith.constant 0 : index
    %c0_10 = arith.constant 0 : index
    %17 = vector.load %arg7[%c0_9, %c0_10] : memref<8x2xf32, #tpu.memory_space<vmem>>, vector<8x2xf32>
    %c0_11 = arith.constant 0 : index
    %c0_12 = arith.constant 0 : index
    %18 = vector.load %arg8[%c0_11, %c0_12] : memref<2x8xf32, #tpu.memory_space<vmem>>, vector<2x8xf32>
    %19 = vector.extract_strided_slice %17 {offsets = [0, 0], sizes = [8, 1], strides = [1, 1]} : vector<8x2xf32> to vector<8x1xf32>
    %20 = vector.extract_strided_slice %18 {offsets = [0, 0], sizes = [1, 8], strides = [1, 1]} : vector<2x8xf32> to vector<1x8xf32>
    %21 = vector.broadcast %19 : vector<8x1xf32> to vector<8x8xf32>
    %22 = vector.broadcast %20 : vector<1x8xf32> to vector<8x8xf32>
    %23 = arith.subf %21, %22 : vector<8x8xf32>
    %24 = arith.mulf %23, %23 : vector<8x8xf32>
    %25 = vector.extract_strided_slice %17 {offsets = [0, 1], sizes = [8, 1], strides = [1, 1]} : vector<8x2xf32> to vector<8x1xf32>
    %26 = vector.extract_strided_slice %18 {offsets = [1, 0], sizes = [1, 8], strides = [1, 1]} : vector<2x8xf32> to vector<1x8xf32>
    %27 = vector.broadcast %25 : vector<8x1xf32> to vector<8x8xf32>
    %28 = vector.broadcast %26 : vector<1x8xf32> to vector<8x8xf32>
    %29 = arith.subf %27, %28 : vector<8x8xf32>
    %30 = arith.mulf %29, %29 : vector<8x8xf32>
    %31 = arith.addf %24, %30 : vector<8x8xf32>
    %32 = arith.addf %16, %31 : vector<8x8xf32>
    %33 = arith.mulf %16, %31 : vector<8x8xf32>
    %34 = math.sqrt %33 : vector<8x8xf32>
    %cst_13 = arith.constant 2.000000e+00 : f32
    %35 = vector.broadcast %cst_13 : f32 to vector<8x8xf32>
    %36 = arith.mulf %35, %34 : vector<8x8xf32>
    %37 = arith.subf %32, %36 : vector<8x8xf32>
    %38 = arith.cmpi eq, %1, %3 : i32
    %cst_14 = arith.constant 1.000000e+00 : f32
    %cst_15 = arith.constant 2.000000e+00 : f32
    %39 = arith.select %38, %cst_14, %cst_15 : f32
    %cst_16 = arith.constant dense<0.000000e+00> : vector<8xf32>
    %40 = vector.multi_reduction <add>, %37, %cst_16 [0] : vector<8x8xf32> to vector<8xf32>
    %41 = vector.shape_cast %40 : vector<8xf32> to vector<1x8xf32>
    %42 = vector.broadcast %39 : f32 to vector<1x8xf32>
    %43 = arith.mulf %42, %41 : vector<1x8xf32>
    %44 = vector.shape_cast %43 : vector<1x8xf32> to vector<1x1x8xf32>
    %c0_17 = arith.constant 0 : index
    %c0_18 = arith.constant 0 : index
    %c0_19 = arith.constant 0 : index
    %45 = vector.load %arg9[%c0_17, %c0_18, %c0_19] : memref<1x1x8xf32, #tpu.memory_space<vmem>>, vector<1x1x8xf32>
    tpu.vector_store %arg9[%c0_17, %c0_18, %c0_19], %44 {strides = array<i32>} : memref<1x1x8xf32, #tpu.memory_space<vmem>>, vector<1x1x8xf32>,
    return
  }
  func.func @transform_0(%arg0: i32, %arg1: memref<1xi32, #tpu.memory_space<smem>>, %arg2: memref<1xi32, #tpu.memory_space<smem>>) -> (i32, i32) {
    %0 = arith.index_cast %arg0 : i32 to index
    %1 = memref.load %arg1[%0] : memref<1xi32, #tpu.memory_space<smem>>
    %c0_i32 = arith.constant 0 : i32
    %c0_i32_0 = arith.constant 0 : i32
    return %1, %c0_i32 : i32, i32
  }
  func.func @transform_1(%arg0: i32, %arg1: memref<1xi32, #tpu.memory_space<smem>>, %arg2: memref<1xi32, #tpu.memory_space<smem>>) -> (i32, i32) {
    %0 = arith.index_cast %arg0 : i32 to index
    %1 = memref.load %arg2[%0] : memref<1xi32, #tpu.memory_space<smem>>
    %c0_i32 = arith.constant 0 : i32
    %c0_i32_0 = arith.constant 0 : i32
    return %c0_i32, %1 : i32, i32
  }
  func.func @transform_2(%arg0: i32, %arg1: memref<1xi32, #tpu.memory_space<smem>>, %arg2: memref<1xi32, #tpu.memory_space<smem>>) -> (i32, i32) {
    %0 = arith.index_cast %arg0 : i32 to index
    %1 = memref.load %arg1[%0] : memref<1xi32, #tpu.memory_space<smem>>
    %c0_i32 = arith.constant 0 : i32
    %c0_i32_0 = arith.constant 0 : i32
    return %1, %c0_i32 : i32, i32
  }
  func.func @transform_3(%arg0: i32, %arg1: memref<1xi32, #tpu.memory_space<smem>>, %arg2: memref<1xi32, #tpu.memory_space<smem>>) -> (i32, i32) {
    %0 = arith.index_cast %arg0 : i32 to index
    %1 = memref.load %arg2[%0] : memref<1xi32, #tpu.memory_space<smem>>
    %c0_i32 = arith.constant 0 : i32
    %c0_i32_0 = arith.constant 0 : i32
    return %c0_i32, %1 : i32, i32
  }
  func.func @transform_4(%arg0: i32, %arg1: memref<1xi32, #tpu.memory_space<smem>>, %arg2: memref<1xi32, #tpu.memory_space<smem>>) -> (i32, i32) {
    %0 = arith.index_cast %arg0 : i32 to index
    %1 = memref.load %arg1[%0] : memref<1xi32, #tpu.memory_space<smem>>
    %c0_i32 = arith.constant 0 : i32
    %c0_i32_0 = arith.constant 0 : i32
    return %1, %c0_i32 : i32, i32
  }
  func.func @transform_5(%arg0: i32, %arg1: memref<1xi32, #tpu.memory_space<smem>>, %arg2: memref<1xi32, #tpu.memory_space<smem>>) -> (i32, i32) {
    %0 = arith.index_cast %arg0 : i32 to index
    %1 = memref.load %arg2[%0] : memref<1xi32, #tpu.memory_space<smem>>
    %c0_i32 = arith.constant 0 : i32
    %c0_i32_0 = arith.constant 0 : i32
    return %c0_i32, %1 : i32, i32
  }
  func.func @transform_6(%arg0: i32, %arg1: memref<1xi32, #tpu.memory_space<smem>>, %arg2: memref<1xi32, #tpu.memory_space<smem>>) -> (i32, i32, i32) {
    %c0_i32 = arith.constant 0 : i32
    %c0_i32_0 = arith.constant 0 : i32
    %c0_i32_1 = arith.constant 0 : i32
    return %arg0, %c0_i32, %c0_i32_0 : i32, i32, i32
  }
}

</mosaic_0001>

<llo_original>
// kernel: tpu_custom_call.1
$region0: #{tpu_custom_call.1}
  #allocation0 [shape = 'u32[]', space=smem, size = 0x4, offset = 0x4, fixed_abs, tag = 'smem constant byte address 0x4 - core index']
  #allocation1 [shape = 'u32[72,128]{1,0:T(1,128)}', space=vmem, size = 0x9000, scoped, tag = 'internal scratch']
  #allocation2 [shape = 's32[1]{0}', space=sflag, size = 0x4, scoped, tag = 'scoped memory for tpu_custom_call.1']
  #allocation3 [shape = 's32[1]{0:T(128)S(6)}', space=smem, size = 0x200, scoped, tag = 'prefetched SMEM operand 0']
  #allocation4 [shape = 's32[1]{0:T(128)S(6)}', space=smem, size = 0x200, scoped, tag = 'prefetched SMEM operand 1']
  %s0 = inlined_call_operand.<no memory space> [shape: s32[1], index: 0, kind: input, shape index: {}]
  %s1 = inlined_call_operand.<no memory space> [shape: s32[1], index: 1, kind: input, shape index: {}]
  %s2 = inlined_call_operand.vmem [shape: f32[8,32], index: 2, kind: input, shape index: {}]
  %s3 = inlined_call_operand.vmem [shape: f32[32,8], index: 3, kind: input, shape index: {}]
  %s4 = inlined_call_operand.vmem [shape: f32[8,1], index: 4, kind: input, shape index: {}]
  %s5 = inlined_call_operand.vmem [shape: f32[1,8], index: 5, kind: input, shape index: {}]
  %s6 = inlined_call_operand.vmem [shape: f32[8,2], index: 6, kind: input, shape index: {}]
  %s7 = inlined_call_operand.vmem [shape: f32[2,8], index: 7, kind: input, shape index: {}]
  %s8 = inlined_call_operand.hbm [shape: f32[1,1,8], index: 8, kind: output, shape index: {}]
  %s9 = sld [smem:[#allocation0]]
  $region34: #{tpu_custom_call.1} parent=0
    _
  %s11 = ssub.s32 1, %s9
  %s12 = scalar_select 0, %s11, %s9
  %13 = sst [smem:[#allocation3]] %s0
  %14 = sst [smem:[#allocation4]] %s1
  $region1: #{tpu_custom_call.1} parent=0
    #allocation5 [shape = 'u8[512]{0}', space=vmem, size = 0x400, scoped, tag = 'output window, operand 0, single buffered']
    #allocation6 [shape = 's32[1]{0}', space=sflag, size = 0x4, scoped, tag = 'scoped memory for tpu_custom_call.1']
    %15 = vsyncpa [#allocation6], 0
    // Predicated region
    $region2: #{tpu_custom_call.1} parent=1 // pred_check
      _
    $region3: #{tpu_custom_call.1} parent=1 // pred_check_branch
      %17 = sbr.rel (0) target = $region5
    $region4: #{tpu_custom_call.1} parent=1 // pred_region
      %s18 = sld [smem:[#allocation3]]
      %p19 = scmp.lt.s32.totalorder %s18, 0
      %s20 = scalar_select %p19, %s18, 0
      %s21 = smul.addr %s20, 8
      %s22 = scalar_lea.vmem %s2, %s21
      %s23 = sld [smem:[#allocation3]]
    $region5: #{tpu_custom_call.1} parent=1 // pred_fallthru
      _
    // Predicated region
    $region6: #{tpu_custom_call.1} parent=1 // pred_check
      _
    $region7: #{tpu_custom_call.1} parent=1 // pred_check_branch
      %25 = sbr.rel (0) target = $region9
    $region8: #{tpu_custom_call.1} parent=1 // pred_region
      %s26 = sld [smem:[#allocation4]]
      %p27 = scmp.lt.s32.totalorder %s26, 0
      %s28 = scalar_select %p27, %s26, 0
      %s29 = smul.addr %s28, 8
      %s30 = scalar_lea.vmem %s3, %s29
      %s31 = sld [smem:[#allocation4]]
    $region9: #{tpu_custom_call.1} parent=1 // pred_fallthru
      _
    // Predicated region
    $region10: #{tpu_custom_call.1} parent=1 // pred_check
      _
    $region11: #{tpu_custom_call.1} parent=1 // pred_check_branch
      %33 = sbr.rel (0) target = $region13
    $region12: #{tpu_custom_call.1} parent=1 // pred_region
      %s34 = sld [smem:[#allocation3]]
      %p35 = scmp.lt.s32.totalorder %s34, 0
      %s36 = scalar_select %p35, %s34, 0
      %s37 = smul.addr %s36, 8
      %s38 = scalar_lea.vmem %s4, %s37
      %s39 = sld [smem:[#allocation3]]
    $region13: #{tpu_custom_call.1} parent=1 // pred_fallthru
      _
    // Predicated region
    $region14: #{tpu_custom_call.1} parent=1 // pred_check
      _
    $region15: #{tpu_custom_call.1} parent=1 // pred_check_branch
      %41 = sbr.rel (0) target = $region17
    $region16: #{tpu_custom_call.1} parent=1 // pred_region
      %s42 = sld [smem:[#allocation4]]
      %p43 = scmp.lt.s32.totalorder %s42, 0
      %s44 = scalar_select %p43, %s42, 0
      %s45 = scalar_lea.vmem %s5, %s44
      %s46 = sld [smem:[#allocation4]]
    $region17: #{tpu_custom_call.1} parent=1 // pred_fallthru
      _
    // Predicated region
    $region18: #{tpu_custom_call.1} parent=1 // pred_check
      _
    $region19: #{tpu_custom_call.1} parent=1 // pred_check_branch
      %48 = sbr.rel (0) target = $region21
    $region20: #{tpu_custom_call.1} parent=1 // pred_region
      %s49 = sld [smem:[#allocation3]]
      %p50 = scmp.lt.s32.totalorder %s49, 0
      %s51 = scalar_select %p50, %s49, 0
      %s52 = smul.addr %s51, 8
      %s53 = scalar_lea.vmem %s6, %s52
      %s54 = sld [smem:[#allocation3]]
    $region21: #{tpu_custom_call.1} parent=1 // pred_fallthru
      _
    // Predicated region
    $region22: #{tpu_custom_call.1} parent=1 // pred_check
      _
    $region23: #{tpu_custom_call.1} parent=1 // pred_check_branch
      %56 = sbr.rel (0) target = $region25
    $region24: #{tpu_custom_call.1} parent=1 // pred_region
      %s57 = sld [smem:[#allocation4]]
      %p58 = scmp.lt.s32.totalorder %s57, 0
      %s59 = scalar_select %p58, %s57, 0
      %s60 = smul.addr %s59, 2
      %s61 = scalar_lea.vmem %s7, %s60
      %s62 = sld [smem:[#allocation4]]
    $region25: #{tpu_custom_call.1} parent=1 // pred_fallthru
      _
    %s63 = sld [smem:[#allocation3]]
    %p64 = scmp.lt.s32.totalorder %s63, 0
    %s65 = scalar_select %p64, %s63, 0
    %s66 = smul.addr %s65, 8
    %s67 = scalar_lea.vmem %s2, %s66
    %s68 = sld [smem:[#allocation4]]
    %p69 = scmp.lt.s32.totalorder %s68, 0
    %s70 = scalar_select %p69, %s68, 0
    %s71 = smul.addr %s70, 8
    %s72 = scalar_lea.vmem %s3, %s71
    %s73 = sld [smem:[#allocation3]]
    %p74 = scmp.lt.s32.totalorder %s73, 0
    %s75 = scalar_select %p74, %s73, 0
    %s76 = smul.addr %s75, 8
    %s77 = scalar_lea.vmem %s4, %s76
    %s78 = sld [smem:[#allocation4]]
    %p79 = scmp.lt.s32.totalorder %s78, 0
    %s80 = scalar_select %p79, %s78, 0
    %s81 = scalar_lea.vmem %s5, %s80
    %s82 = sld [smem:[#allocation3]]
    %p83 = scmp.lt.s32.totalorder %s82, 0
    %s84 = scalar_select %p83, %s82, 0
    %s85 = smul.addr %s84, 8
    %s86 = scalar_lea.vmem %s6, %s85
    %s87 = sld [smem:[#allocation4]]
    %p88 = scmp.lt.s32.totalorder %s87, 0
    %s89 = scalar_select %p88, %s87, 0
    %s90 = smul.addr %s89, 2
    %s91 = scalar_lea.vmem %s7, %s90
    %s92 = sld [smem:[#allocation3]]
    %p93 = scmp.lt.s32.totalorder %s92, 0
    %s94 = scalar_select %p93, %s92, 0
    %s95 = smul.addr %s94, 8
    %s96 = scalar_lea.vmem %s2, %s95
    %s97 = sld [smem:[#allocation3]]
    %s98 = sld [smem:[#allocation4]]
    %p99 = scmp.lt.s32.totalorder %s98, 0
    %s100 = scalar_select %p99, %s98, 0
    %s101 = smul.addr %s100, 8
    %s102 = scalar_lea.vmem %s3, %s101
    %s103 = sld [smem:[#allocation4]]
    %s104 = sld [smem:[#allocation3]]
    %p105 = scmp.lt.s32.totalorder %s104, 0
    %s106 = scalar_select %p105, %s104, 0
    %s107 = smul.addr %s106, 8
    %s108 = scalar_lea.vmem %s4, %s107
    %s109 = sld [smem:[#allocation3]]
    %s110 = sld [smem:[#allocation4]]
    %p111 = scmp.lt.s32.totalorder %s110, 0
    %s112 = scalar_select %p111, %s110, 0
    %s113 = scalar_lea.vmem %s5, %s112
    %s114 = sld [smem:[#allocation4]]
    %s115 = sld [smem:[#allocation3]]
    %p116 = scmp.lt.s32.totalorder %s115, 0
    %s117 = scalar_select %p116, %s115, 0
    %s118 = smul.addr %s117, 8
    %s119 = scalar_lea.vmem %s6, %s118
    %s120 = sld [smem:[#allocation3]]
    %s121 = sld [smem:[#allocation4]]
    %p122 = scmp.lt.s32.totalorder %s121, 0
    %s123 = scalar_select %p122, %s121, 0
    %s124 = smul.addr %s123, 2
    %s125 = scalar_lea.vmem %s7, %s124
    %s126 = sld [smem:[#allocation4]]
    %s127 = sld [smem:[#allocation3]]
    %s128 = sld [smem:[#allocation4]]
    %v129 = vld [vmem:[%s96] sm:$0xff]
    %v130 = vld [vmem:[%s102] sm:$0xff]
    %v131 = vld [vmem:[%s102 + $0x8] sm:$0xff]
    %v132 = vld [vmem:[%s102 + $0x10] sm:$0xff]
    %v133 = vld [vmem:[%s102 + $0x18] sm:$0xff]
    %vm134 = vcmask 261120
    %v136 = vsel %vm134, %v129, 0
    %138 = vmatpush.msra.mxu0 0.0
    %139 = vmatpush.msra.mxu0 0.0
    %140 = vmatpush.msra.mxu0 0.0
    %141 = vmatpush.msra.mxu0 0.0
    %142 = vmatpush.msra.mxu0 0.0
    %143 = vmatpush.msra.mxu0 0.0
    %144 = vmatpush.msra.mxu0 0.0
    %145 = vmatpush.msra.mxu0 0.0
    %146 = vmatpush.msra.mxu0 0.0
    %147 = vmatpush.msra.mxu0 0.0
    %148 = vmatpush.msra.mxu0 0.0
    %149 = vmatpush.msra.mxu0 0.0
    %150 = vmatpush.msra.mxu0 %v133
    %151 = vmatpush.msra.mxu0 %v132
    %152 = vmatpush.msra.mxu0 %v131
    %153 = vmatpush.msra.mxu0 %v130
    %154 = vmatmul.f32.gmra.mxu0 %v136
    %v155 = vpop.f32.mrf.mxu0
    %v156 = vadd.f32 0.0, %v155
    %157 = vdwg.mxu0
    %v158 = vld [vmem:[%s108] sm:$0xff]
    %v159 = vld [vmem:[%s113] sm:$0x1]
    %161 = vset.pattern.permute.xlu0 0
    %162 = vperm.xlu0 %161, %v158
    %v163 = vpop.permute.xlu0 %162
    %v166 = vperm.slane %v159, 0
    %v168 = vadd.f32 %v163, %v166
    %v169 = vmul.f32 %v156, 2.0
    %v170 = vsub.f32 %v168, %v169
    %v171 = vmax.f32 %v170, 0.0
    %v172 = vld [vmem:[%s119] sm:$0xff]
    %v173 = vld [vmem:[%s125] sm:$0x3]
    %175 = vset.pattern.permute.xlu0 0
    %176 = vperm.xlu0 %175, %v172
    %v177 = vpop.permute.xlu0 %176
    %v179 = vperm.slane %v173, 0
    %v180 = vsub.f32 %v177, %v179
    %v181 = vmul.f32 %v180, %v180
    %182 = vset.pattern.permute.xlu0 1
    %183 = vperm.xlu0 %182, %v172
    %v184 = vpop.permute.xlu0 %183
    %v186 = vperm.slane %v173, 1
    %v187 = vsub.f32 %v184, %v186
    %v188 = vmul.f32 %v187, %v187
    %v189 = vadd.f32 %v181, %v188
    %v190 = vadd.f32 %v171, %v189
    %v191 = vmul.f32 %v171, %v189
    %v192 = vrsqrt.pop %v191
    %v193 = vmul.f32 %v192, %v191
    %v194 = vmul.f32 %v193, %v192
    %v195 = vmul.f32 0.5, %v194
    %v196 = vsub.f32 1.5, %v195
    %v197 = vmul.f32 %v192, %v196
    %v198 = vmul.f32 %v191, %v197
    %vm199 = vcmp.eq.f32.partialorder %v191, inf
    %v200 = vsel %vm199, %v191, %v198
    %vm201 = vcmp.eq.f32.partialorder %v191, 0.0
    %v202 = vand.u32 %v191, 2147483648
    %v203 = vsel %vm201, %v202, %v200
    %v204 = vmul.f32 %v203, 2.0
    %v205 = vsub.f32 %v190, %v204
    %p206 = scmp.eq.s32.totalorder %s127, %s128
    %s207 = scalar_select %p206, 1.0, 2.0
    %vm208 = vcmask 64512
    %v209 = vsel %vm208, %v205, 0.0
    %v210 = vrot.slane %v209, 4
    %v211 = vadd.f32 %v209, %v210
    %v212 = vrot.slane %v211, 2
    %v213 = vadd.f32 %v211, %v212
    %v214 = vrot.slane %v213, 1
    %v215 = vadd.f32 %v213, %v214
    %v216 = vstv %s207
    %v217 = vmul.f32 %v216, %v215
    %vm218 = vcmask 57344
    %219 = vst.msk [vmem:[#allocation5] sm:$0x1] %vm218, %v217
    // Predicated region
    $region26: #{tpu_custom_call.1} parent=1 // pred_check
      _
    $region27: #{tpu_custom_call.1} parent=1 // pred_check_branch
      %221 = sbr.rel (0) target = $region29
    $region28: #{tpu_custom_call.1} parent=1 // pred_region
      %223 = vsyncadd [#allocation6], 0
      %s225 = sshll.u32 [#allocation5], 4
      %s226 = int_to_ptr.vmem [resolvable:$true] %s225
      %s227 = sshll.u32 %s8, 4
      %s228 = int_to_ptr.hbm [resolvable:$true] %s227
      %230 = dma.vmem_to_hbm [thread:$0]  %s226, 16, %s228, [#allocation6]
    $region29: #{tpu_custom_call.1} parent=1 // pred_fallthru
      _
    // Predicated region
    $region30: #{tpu_custom_call.1} parent=1 // pred_check
      _
    $region31: #{tpu_custom_call.1} parent=1 // pred_check_branch
      %232 = sbr.rel (0) target = $region33
    $region32: #{tpu_custom_call.1} parent=1 // pred_region
      %234 = dma.done [#allocation6], 16
    $region33: #{tpu_custom_call.1} parent=1 // pred_fallthru
      _
    %235 = vsyncpa [#allocation6], 1

</llo_original>
